<compile_context>
chip_gen: v5e
topology: v5e:2x2
jax: 0.10.0
libtpu: 0.0.40
codegen_flags: <defaults>
</compile_context>

<pallas_src>
import functools

import jax
import jax.numpy as jnp
from jax.experimental import pallas as pl
from jax.experimental.pallas import tpu as pltpu


def _round_up(x, m):
    return ((x + m - 1) // m) * m


# ---------------------------------------------------------------------------
# Kernel: two MXU matmuls into a lane-aligned fused block, ReLU, two lane
# reductions (second attention layer, biases pre-folded), sigmoid gating and
# the normalized weighted sum -- all in VMEM in a single invocation / tile.
# ---------------------------------------------------------------------------
def _attention_fusion_kernel(
    tab_ref,   # [B, Dt]
    esm_ref,   # [B, De]
    w_ref,     # [Dt+De+3, Fout] packed weight (see pack_params)
    out_ref,   # [B, Dout]
    *,
    dt, de, dout, hblk, dblk, tab_identity, esm_identity,
):
    tab = tab_ref[...]
    esm = esm_ref[...]

    r = dt + de                         # first sublane row after the weight rows
    w_tab = w_ref[0:dt, :]              # [Dt, Fout]
    w_esm = w_ref[dt:r, :]              # [De, Fout]
    bias = w_ref[r:r + 1, :]            # [1, Fout] first-layer / projection biases

    # Block-diagonal fused first layer + projections, biases added on the VPU.
    fused = (jnp.dot(tab, w_tab, preferred_element_type=jnp.float32)
             + jnp.dot(esm, w_esm, preferred_element_type=jnp.float32)
             + bias)                    # [B, Fout]

    # Hidden blocks are 128-lane aligned -> whole-vreg slices.
    ht = jnp.maximum(fused[:, 0:hblk], 0.0)
    he = jnp.maximum(fused[:, hblk:2 * hblk], 0.0)

    # Linear(H, 1) weights packed as two sublane rows of w_ref.  The scalar
    # biases b2t/b2e are folded in via a constant-1 column inside each hidden
    # block (relu(1) * b2 enters the same lane reduction).
    w2t = w_ref[r + 1:r + 2, 0:hblk]            # [1, Hblk]
    w2e = w_ref[r + 2:r + 3, hblk:2 * hblk]     # [1, Hblk]
    wt = jax.nn.sigmoid(jnp.sum(ht * w2t, axis=-1, keepdims=True))   # [B, 1]
    we = jax.nn.sigmoid(jnp.sum(he * w2e, axis=-1, keepdims=True))   # [B, 1]

    # Projections: identity sides are specialized away at trace time and read
    # straight from the (separate) input operand -- no lane shuffles.
    col = 2 * hblk
    if tab_identity:
        tab_proj = tab
    else:
        tab_proj = fused[:, col:col + dout]
        col += dblk
    esm_proj = esm if esm_identity else fused[:, col:col + dout]

    # Exact reciprocal keeps the 1e-5 tolerance vs. the reference.
    inv_total = pl.reciprocal(wt + we + 1e-8, approx=False)
    out_ref[...] = (wt * tab_proj + we * esm_proj) * inv_total


# ---------------------------------------------------------------------------
# Parameter packing (one-time, trace-time).
#
# Packed weight layout (rows = sublanes, columns = lanes):
#   rows [0, Dt)        : tabular-side weights (w1t | wpt if non-identity)
#   rows [Dt, Dt+De)    : esm-side weights     (w1e | wpe if non-identity)
#   row  Dt+De          : bias row (b1t | b1e | projection biases) with a
#                         constant 1.0 at lane H of each hidden block
#   row  Dt+De+1        : w2t (lanes [0,H)) and b2t (lane H)
#   row  Dt+De+2        : w2e (lanes [Hblk, Hblk+H)) and b2e (lane Hblk+H)
# Column blocks (all 128-lane aligned):
#   [0, Hblk)                 tabular attention hidden
#   [Hblk, 2*Hblk)            esm attention hidden
#   [2*Hblk, ...)             non-identity projections, one Dblk block each
# ---------------------------------------------------------------------------
def pack_params(p, tabular_dim, esm_dim, hidden_dim):
    Dt, De, H = tabular_dim, esm_dim, hidden_dim
    Dout = max(Dt, De)
    tab_identity = (Dt == Dout)         # nn.Identity() in the PyTorch module
    esm_identity = (De == Dout)
    Hblk = _round_up(H + 1, 128)        # +1 reserves the constant-1 bias column
    Dblk = _round_up(Dout, 128)
    n_proj = int(not tab_identity) + int(not esm_identity)
    Fout = 2 * Hblk + n_proj * Dblk
    rows = Dt + De + 3

    bias_row = Dt + De
    w2t_row = Dt + De + 1
    w2e_row = Dt + De + 2

    w = jnp.zeros((rows, Fout), jnp.float32)

    # tabular attention hidden layer
    w = w.at[0:Dt, 0:H].set(p["w1t"])
    w = w.at[bias_row, 0:H].set(p["b1t"])
    w = w.at[bias_row, H].set(1.0)                  # constant column for b2t
    w = w.at[w2t_row, 0:H].set(p["w2t"])
    w = w.at[w2t_row, H].set(p["b2t"])
    # esm attention hidden layer
    w = w.at[Dt:Dt + De, Hblk:Hblk + H].set(p["w1e"])
    w = w.at[bias_row, Hblk:Hblk + H].set(p["b1e"])
    w = w.at[bias_row, Hblk + H].set(1.0)           # constant column for b2e
    w = w.at[w2e_row, Hblk:Hblk + H].set(p["w2e"])
    w = w.at[w2e_row, Hblk + H].set(p["b2e"])

    col = 2 * Hblk
    if not tab_identity:
        w = w.at[0:Dt, col:col + Dout].set(p["wpt"])
        w = w.at[bias_row, col:col + Dout].set(p["bpt"])
        col += Dblk
    if not esm_identity:
        w = w.at[Dt:Dt + De, col:col + Dout].set(p["wpe"])
        w = w.at[bias_row, col:col + Dout].set(p["bpe"])
        col += Dblk

    cfg = dict(dt=Dt, de=De, dout=Dout, hblk=Hblk, dblk=Dblk,
               tab_identity=tab_identity, esm_identity=esm_identity)
    return dict(wpack=w, cfg=cfg)


# ---------------------------------------------------------------------------
# Batch tiling policy for the throughput path.
# ---------------------------------------------------------------------------
def _pick_block_b(batch):
    if batch <= 1024:
        return None                     # whole problem fits in VMEM; no-grid path
    for tb in (2048, 1024, 512, 256, 128):
        if batch % tb == 0:
            return tb
    # TODO(synk): masked/padded remainder tile for batches not divisible by 128.
    return None


# ---------------------------------------------------------------------------
# Wrapper: small-B -> single no-grid invocation; large-B -> batch-tiled grid
# with the packed weight resident and the batch axis sharded across cores.
# ---------------------------------------------------------------------------
def attention_fusion(tab, esm, packed, *, block_b=None):
    cfg = packed["cfg"]
    w = packed["wpack"]
    B = tab.shape[0]
    dt, de, dout = cfg["dt"], cfg["de"], cfg["dout"]
    rows, fout = w.shape

    tab = tab.astype(jnp.float32)
    esm = esm.astype(jnp.float32)

    kernel = functools.partial(
        _attention_fusion_kernel,
        dt=dt, de=de, dout=dout, hblk=cfg["hblk"], dblk=cfg["dblk"],
        tab_identity=cfg["tab_identity"], esm_identity=cfg["esm_identity"])

    cost = pl.CostEstimate(
        flops=2 * B * (dt + de) * fout + 12 * B * dout,
        transcendentals=2 * B,
        bytes_accessed=4 * (B * (dt + de) + rows * fout + B * dout))

    out_shape = jax.ShapeDtypeStruct((B, dout), jnp.float32)

    if block_b is None:
        block_b = _pick_block_b(B)

    if block_b is None:
        # Latency path: no grid, everything resident in VMEM for one invocation.
        return pl.pallas_call(
            kernel,
            out_shape=out_shape,
            in_specs=[pl.BlockSpec(memory_space=pltpu.MemorySpace.VMEM)] * 3,
            out_specs=pl.BlockSpec(memory_space=pltpu.MemorySpace.VMEM),
            cost_estimate=cost,
        )(tab, esm, w)

    # Throughput path: tile the batch (>=512 rows), keep the packed weight
    # resident (constant index_map), shard the batch axis across TensorCores.
    grid = (B // block_b,)
    return pl.pallas_call(
        kernel,
        out_shape=out_shape,
        grid=grid,
        in_specs=[
            pl.BlockSpec((block_b, dt), lambda i: (i, 0)),
            pl.BlockSpec((block_b, de), lambda i: (i, 0)),
            pl.BlockSpec((rows, fout), lambda i: (0, 0)),   # resident weight
        ],
        out_specs=pl.BlockSpec((block_b, dout), lambda i: (i, 0)),
        compiler_params=pltpu.CompilerParams(
            dimension_semantics=("parallel",)),
        cost_estimate=cost,
    )(tab, esm, w)


# ---------------------------------------------------------------------------
# Deterministic PyTorch-style init (uniform +-1/sqrt(fan_in)).
# Weights stored as [in, out] (i.e. torch W.T); biases as 1-D.
# ---------------------------------------------------------------------------
def init_params(key, tabular_dim, esm_dim, hidden_dim):
    Dout = max(tabular_dim, esm_dim)
    keys = jax.random.split(key, 12)

    def lin(kw, kb, fan_in, fan_out):
        bound = 1.0 / (fan_in ** 0.5)
        w = jax.random.uniform(kw, (fan_in, fan_out), jnp.float32, -bound, bound)
        b = jax.random.uniform(kb, (fan_out,), jnp.float32, -bound, bound)
        return w, b

    p = {}
    p["w1t"], p["b1t"] = lin(keys[0], keys[1], tabular_dim, hidden_dim)
    w2t, b2t = lin(keys[2], keys[3], hidden_dim, 1)
    p["w2t"], p["b2t"] = w2t[:, 0], b2t[0]
    p["w1e"], p["b1e"] = lin(keys[4], keys[5], esm_dim, hidden_dim)
    w2e, b2e = lin(keys[6], keys[7], hidden_dim, 1)
    p["w2e"], p["b2e"] = w2e[:, 0], b2e[0]
    if tabular_dim != Dout:
        p["wpt"], p["bpt"] = lin(keys[8], keys[9], tabular_dim, Dout)
    if esm_dim != Dout:
        p["wpe"], p["bpe"] = lin(keys[10], keys[11], esm_dim, Dout)
    return p


# ---------------------------------------------------------------------------
# Pure-JAX reference mirroring the PyTorch module exactly.
# ---------------------------------------------------------------------------
def reference(tab, esm, p):
    ht = jnp.maximum(tab @ p["w1t"] + p["b1t"], 0.0)
    wt = jax.nn.sigmoid(ht @ p["w2t"][:, None] + p["b2t"])
    he = jnp.maximum(esm @ p["w1e"] + p["b1e"], 0.0)
    we = jax.nn.sigmoid(he @ p["w2e"][:, None] + p["b2e"])
    total = wt + we + 1e-8
    wt, we = wt / total, we / total
    tab_proj = tab @ p["wpt"] + p["bpt"] if "wpt" in p else tab
    esm_proj = esm @ p["wpe"] + p["bpe"] if "wpe" in p else esm
    return wt * tab_proj + we * esm_proj


if __name__ == "__main__":
    # Small shapes consistent with the module's forward:
    #   tabular_features: [B, tabular_dim], esm_features: [B, esm_dim]
    B, TAB_DIM, ESM_DIM, HIDDEN = 8, 16, 32, 32

    key = jax.random.PRNGKey(0)
    k_tab, k_esm, k_params, k_tab2, k_esm2 = jax.random.split(key, 5)

    tab = jax.random.normal(k_tab, (B, TAB_DIM), jnp.float32)
    esm = jax.random.normal(k_esm, (B, ESM_DIM), jnp.float32)
    params = init_params(k_params, TAB_DIM, ESM_DIM, HIDDEN)
    packed = pack_params(params, TAB_DIM, ESM_DIM, HIDDEN)

    # Small-batch (no-grid, fully VMEM-resident) path.
    out = jax.block_until_ready(attention_fusion(tab, esm, packed))
    ref = reference(tab, esm, params)
    assert out.shape == (B, max(TAB_DIM, ESM_DIM))
    assert jnp.allclose(out, ref, atol=1e-5, rtol=1e-5), \
        float(jnp.max(jnp.abs(out - ref)))

    # Large-batch (tiled-grid, resident-weight, parallel batch axis) path.
    BL = 2048
    tab_l = jax.random.normal(k_tab2, (BL, TAB_DIM), jnp.float32)
    esm_l = jax.random.normal(k_esm2, (BL, ESM_DIM), jnp.float32)
    out_l = jax.block_until_ready(attention_fusion(tab_l, esm_l, packed))
    ref_l = reference(tab_l, esm_l, params)
    assert out_l.shape == (BL, max(TAB_DIM, ESM_DIM))
    assert jnp.allclose(out_l, ref_l, atol=1e-5, rtol=1e-5), \
        float(jnp.max(jnp.abs(out_l - ref_l)))

    print("KERNEL_OK")
</pallas_src>

<mosaic_0001>
module attributes {stable_mosaic.version = 11 : i64} {
  func.func @_attention_fusion_kernel(%arg0: memref<8x16xf32, #tpu.memory_space<vmem>>, %arg1: memref<8x32xf32, #tpu.memory_space<vmem>>, %arg2: memref<51x384xf32, #tpu.memory_space<vmem>>, %arg3: memref<8x32xf32, #tpu.memory_space<vmem>>) attributes {dimension_semantics = [], scalar_prefetch = 0 : i64, scratch_operands = 0 : i64, tpu.core_type = #tpu.core_type<tc>} {
    %c0 = arith.constant 0 : index
    %c0_0 = arith.constant 0 : index
    %0 = vector.load %arg0[%c0, %c0_0] : memref<8x16xf32, #tpu.memory_space<vmem>>, vector<8x16xf32>
    %c0_1 = arith.constant 0 : index
    %c0_2 = arith.constant 0 : index
    %1 = vector.load %arg1[%c0_1, %c0_2] : memref<8x32xf32, #tpu.memory_space<vmem>>, vector<8x32xf32>
    %c0_3 = arith.constant 0 : index
    %c0_4 = arith.constant 0 : index
    %2 = vector.load %arg2[%c0_3, %c0_4] : memref<51x384xf32, #tpu.memory_space<vmem>>, vector<16x384xf32>
    %c16 = arith.constant 16 : index
    %c0_5 = arith.constant 0 : index
    %3 = vector.load %arg2[%c16, %c0_5] : memref<51x384xf32, #tpu.memory_space<vmem>>, vector<32x384xf32>
    %c48 = arith.constant 48 : index
    %c0_6 = arith.constant 0 : index
    %4 = vector.load %arg2[%c48, %c0_6] : memref<51x384xf32, #tpu.memory_space<vmem>>, vector<1x384xf32>
    %cst = arith.constant dense<0.000000e+00> : vector<8x384xf32>
    %5 = tpu.matmul %0, %2, %cst {dimension_numbers = #tpu.dot_dimension_numbers<[1], [0], [0], [1], [0, 0, 1, 1], [], []>} : vector<8x16xf32>, vector<16x384xf32>, vector<8x384xf32> -> vector<8x384xf32>
    %cst_7 = arith.constant dense<0.000000e+00> : vector<8x384xf32>
    %6 = tpu.matmul %1, %3, %cst_7 {dimension_numbers = #tpu.dot_dimension_numbers<[1], [0], [0], [1], [0, 0, 1, 1], [], []>} : vector<8x32xf32>, vector<32x384xf32>, vector<8x384xf32> -> vector<8x384xf32>
    %7 = arith.addf %5, %6 : vector<8x384xf32>
    %8 = vector.broadcast %4 : vector<1x384xf32> to vector<8x384xf32>
    %9 = arith.addf %7, %8 : vector<8x384xf32>
    %10 = vector.extract_strided_slice %9 {offsets = [0, 0], sizes = [8, 128], strides = [1, 1]} : vector<8x384xf32> to vector<8x128xf32>
    %cst_8 = arith.constant 0.000000e+00 : f32
    %11 = vector.broadcast %cst_8 : f32 to vector<8x128xf32>
    %12 = arith.maximumf %10, %11 : vector<8x128xf32>
    %13 = vector.extract_strided_slice %9 {offsets = [0, 128], sizes = [8, 128], strides = [1, 1]} : vector<8x384xf32> to vector<8x128xf32>
    %cst_9 = arith.constant 0.000000e+00 : f32
    %14 = vector.broadcast %cst_9 : f32 to vector<8x128xf32>
    %15 = arith.maximumf %13, %14 : vector<8x128xf32>
    %c49 = arith.constant 49 : index
    %c0_10 = arith.constant 0 : index
    %16 = vector.load %arg2[%c49, %c0_10] : memref<51x384xf32, #tpu.memory_space<vmem>>, vector<1x128xf32>
    %c50 = arith.constant 50 : index
    %c128 = arith.constant 128 : index
    %17 = vector.load %arg2[%c50, %c128] : memref<51x384xf32, #tpu.memory_space<vmem>>, vector<1x128xf32>
    %18 = vector.broadcast %16 : vector<1x128xf32> to vector<8x128xf32>
    %19 = arith.mulf %12, %18 : vector<8x128xf32>
    %cst_11 = arith.constant dense<0.000000e+00> : vector<8xf32>
    %20 = vector.multi_reduction <add>, %19, %cst_11 [1] : vector<8x128xf32> to vector<8xf32>
    %21 = vector.shape_cast %20 : vector<8xf32> to vector<8x1xf32>
    %22 = arith.negf %21 : vector<8x1xf32>
    %23 = math.exp %22 : vector<8x1xf32>
    %cst_12 = arith.constant 1.000000e+00 : f32
    %24 = vector.broadcast %cst_12 : f32 to vector<8x1xf32>
    %25 = arith.addf %24, %23 : vector<8x1xf32>
    %26 = arith.divf %24, %25 : vector<8x1xf32>
    %27 = vector.broadcast %17 : vector<1x128xf32> to vector<8x128xf32>
    %28 = arith.mulf %15, %27 : vector<8x128xf32>
    %cst_13 = arith.constant dense<0.000000e+00> : vector<8xf32>
    %29 = vector.multi_reduction <add>, %28, %cst_13 [1] : vector<8x128xf32> to vector<8xf32>
    %30 = vector.shape_cast %29 : vector<8xf32> to vector<8x1xf32>
    %31 = arith.negf %30 : vector<8x1xf32>
    %32 = math.exp %31 : vector<8x1xf32>
    %cst_14 = arith.constant 1.000000e+00 : f32
    %33 = vector.broadcast %cst_14 : f32 to vector<8x1xf32>
    %34 = arith.addf %33, %32 : vector<8x1xf32>
    %35 = arith.divf %33, %34 : vector<8x1xf32>
    %36 = vector.extract_strided_slice %9 {offsets = [0, 256], sizes = [8, 32], strides = [1, 1]} : vector<8x384xf32> to vector<8x32xf32>
    %37 = arith.addf %26, %35 : vector<8x1xf32>
    %cst_15 = arith.constant 9.99999993E-9 : f32
    %38 = vector.broadcast %cst_15 : f32 to vector<8x1xf32>
    %39 = arith.addf %37, %38 : vector<8x1xf32>
    %40 = tpu.reciprocal %39 : vector<8x1xf32> -> vector<8x1xf32>
    %41 = vector.broadcast %26 : vector<8x1xf32> to vector<8x32xf32>
    %42 = arith.mulf %41, %36 : vector<8x32xf32>
    %43 = vector.broadcast %35 : vector<8x1xf32> to vector<8x32xf32>
    %44 = arith.mulf %43, %1 : vector<8x32xf32>
    %45 = arith.addf %42, %44 : vector<8x32xf32>
    %46 = vector.broadcast %40 : vector<8x1xf32> to vector<8x32xf32>
    %47 = arith.mulf %45, %46 : vector<8x32xf32>
    %c0_16 = arith.constant 0 : index
    %c0_17 = arith.constant 0 : index
    %48 = vector.load %arg3[%c0_16, %c0_17] : memref<8x32xf32, #tpu.memory_space<vmem>>, vector<8x32xf32>
    tpu.vector_store %arg3[%c0_16, %c0_17], %47 {strides = array<i32>} : memref<8x32xf32, #tpu.memory_space<vmem>>, vector<8x32xf32>,
    return
  }
}

</mosaic_0001>

<llo_original>
// kernel: tpu_custom_call.1
$region0: #{tpu_custom_call.1}
  #allocation0 [shape = 'u32[]', space=smem, size = 0x4, offset = 0x4, fixed_abs, tag = 'smem constant byte address 0x4 - core index']
  #allocation1 [shape = 'u32[72,128]{1,0:T(1,128)}', space=vmem, size = 0x9000, scoped, tag = 'internal scratch']
  %s0 = inlined_call_operand.hbm [shape: f32[8,16], index: 0, kind: input, shape index: {}]
  %s1 = inlined_call_operand.hbm [shape: f32[8,32], index: 1, kind: input, shape index: {}]
  %s2 = inlined_call_operand.hbm [shape: f32[51,384], index: 2, kind: input, shape index: {}]
  %s3 = inlined_call_operand.hbm [shape: f32[8,32], index: 3, kind: output, shape index: {}]
  %s4 = sld [smem:[#allocation0]]
  $region34: #{tpu_custom_call.1} parent=0
    _
  %s6 = ssub.s32 1, %s4
  %s7 = scalar_select 0, %s6, %s4
  $region1: #{tpu_custom_call.1} parent=0
    #allocation2 [shape = 'u8[4096]{0}', space=vmem, size = 0x1000, scoped, tag = 'input window, operand 0, single buffered']
    #allocation3 [shape = 's32[1]{0}', space=sflag, size = 0x4, scoped, tag = 'scoped memory for tpu_custom_call.1']
    #allocation4 [shape = 's32[1]{0}', space=sflag, size = 0x4, scoped, tag = 'scoped memory for tpu_custom_call.1']
    #allocation5 [shape = 'u8[4096]{0}', space=vmem, size = 0x1000, scoped, tag = 'input window, operand 1, single buffered']
    #allocation6 [shape = 's32[1]{0}', space=sflag, size = 0x4, scoped, tag = 'scoped memory for tpu_custom_call.1']
    #allocation7 [shape = 'u8[86016]{0}', space=vmem, size = 0x15000, scoped, tag = 'input window, operand 2, single buffered']
    #allocation8 [shape = 'u8[4096]{0}', space=vmem, size = 0x1000, scoped, tag = 'output window, operand 0, single buffered']
    %8 = vsyncpa [#allocation3], 0
    %9 = vsyncpa [#allocation6], 0
    %10 = vsyncpa [#allocation4], 0
    // Predicated region
    $region2: #{tpu_custom_call.1} parent=1 // pred_check
      _
    $region3: #{tpu_custom_call.1} parent=1 // pred_check_branch
      %12 = sbr.rel (0) target = $region5
    $region4: #{tpu_custom_call.1} parent=1 // pred_region
      %14 = vsyncadd [#allocation3], 0
      %s16 = sshll.u32 %s0, 4
      %s17 = int_to_ptr.hbm [resolvable:$true] %s16
      %s18 = sshll.u32 [#allocation2], 4
      %s19 = int_to_ptr.vmem [resolvable:$true] %s18
      %21 = dma.hbm_to_vmem [thread:$0]  %s17, 128, %s19, [#allocation3]
    $region5: #{tpu_custom_call.1} parent=1 // pred_fallthru
      _
    // Predicated region
    $region6: #{tpu_custom_call.1} parent=1 // pred_check
      _
    $region7: #{tpu_custom_call.1} parent=1 // pred_check_branch
      %23 = sbr.rel (0) target = $region9
    $region8: #{tpu_custom_call.1} parent=1 // pred_region
      %25 = vsyncadd [#allocation6], 0
      %s27 = sshll.u32 %s1, 4
      %s28 = int_to_ptr.hbm [resolvable:$true] %s27
      %s29 = sshll.u32 [#allocation5], 4
      %s30 = int_to_ptr.vmem [resolvable:$true] %s29
      %32 = dma.hbm_to_vmem [thread:$0]  %s28, 128, %s30, [#allocation6]
    $region9: #{tpu_custom_call.1} parent=1 // pred_fallthru
      _
    // Predicated region
    $region10: #{tpu_custom_call.1} parent=1 // pred_check
      _
    $region11: #{tpu_custom_call.1} parent=1 // pred_check_branch
      %34 = sbr.rel (0) target = $region13
    $region12: #{tpu_custom_call.1} parent=1 // pred_region
      %36 = vsyncadd [#allocation6], 0
      %s37 = sshll.u32 %s2, 4
      %s38 = int_to_ptr.hbm [resolvable:$true] %s37
      %s39 = sshll.u32 [#allocation7], 4
      %s40 = int_to_ptr.vmem [resolvable:$true] %s39
      %45 = dma.hbm_to_vmem [thread:$0]  %s38, 2688, %s40, [#allocation6], 384, 384, 24
    $region13: #{tpu_custom_call.1} parent=1 // pred_fallthru
      _
    // Predicated region
    $region14: #{tpu_custom_call.1} parent=1 // pred_check
      _
    $region15: #{tpu_custom_call.1} parent=1 // pred_check_branch
      %47 = sbr.rel (0) target = $region17
    $region16: #{tpu_custom_call.1} parent=1 // pred_region
      %49 = dma.done [#allocation3], 128
    $region17: #{tpu_custom_call.1} parent=1 // pred_fallthru
      _
    // Predicated region
    $region18: #{tpu_custom_call.1} parent=1 // pred_check
      _
    $region19: #{tpu_custom_call.1} parent=1 // pred_check_branch
      %51 = sbr.rel (0) target = $region21
    $region20: #{tpu_custom_call.1} parent=1 // pred_region
      %53 = dma.done [#allocation6], 128
    $region21: #{tpu_custom_call.1} parent=1 // pred_fallthru
      _
    // Predicated region
    $region22: #{tpu_custom_call.1} parent=1 // pred_check
      _
    $region23: #{tpu_custom_call.1} parent=1 // pred_check_branch
      %55 = sbr.rel (0) target = $region25
    $region24: #{tpu_custom_call.1} parent=1 // pred_region
      %57 = dma.done [#allocation6], 2688
    $region25: #{tpu_custom_call.1} parent=1 // pred_fallthru
      _
    %v58 = vld [vmem:[#allocation2] sm:$0xff]
    %v59 = vld [vmem:[#allocation5] sm:$0xff]
    %v60 = vld [vmem:[#allocation7] sm:$0xff]
    %v61 = vld [vmem:[#allocation7 + $0x8] sm:$0xff]
    %v62 = vld [vmem:[#allocation7 + $0x10] sm:$0xff]
    %v63 = vld [vmem:[#allocation7 + $0x18] sm:$0xff]
    %v64 = vld [vmem:[#allocation7 + $0x20] sm:$0xff]
    %v65 = vld [vmem:[#allocation7 + $0x28] sm:$0xff]
    %v66 = vld [vmem:[#allocation7 + $0x30] sm:$0xff]
    %v67 = vld [vmem:[#allocation7 + $0x38] sm:$0xff]
    %v68 = vld [vmem:[#allocation7 + $0x40] sm:$0xff]
    %v69 = vld [vmem:[#allocation7 + $0x48] sm:$0xff]
    %v70 = vld [vmem:[#allocation7 + $0x50] sm:$0xff]
    %v71 = vld [vmem:[#allocation7 + $0x58] sm:$0xff]
    %v72 = vld [vmem:[#allocation7 + $0x60] sm:$0xff]
    %v73 = vld [vmem:[#allocation7 + $0x68] sm:$0xff]
    %v74 = vld [vmem:[#allocation7 + $0x70] sm:$0xff]
    %v75 = vld [vmem:[#allocation7 + $0x78] sm:$0xff]
    %v76 = vld [vmem:[#allocation7 + $0x80] sm:$0xff]
    %v77 = vld [vmem:[#allocation7 + $0x88] sm:$0xff]
    %s78 = scalar_lea.vmem [#allocation7], 144
    %v79 = vld [vmem:[%s78] ss:$8 sm:$0x7]
    %vm80 = vcmask 261120
    %v82 = vsel %vm80, %v59, 0
    %84 = vmatpush.msra.mxu0 0.0
    %85 = vmatpush.msra.mxu0 0.0
    %86 = vmatpush.msra.mxu0 0.0
    %87 = vmatpush.msra.mxu0 0.0
    %88 = vmatpush.msra.mxu0 0.0
    %89 = vmatpush.msra.mxu0 0.0
    %90 = vmatpush.msra.mxu0 0.0
    %91 = vmatpush.msra.mxu0 0.0
    %92 = vmatpush.msra.mxu0 0.0
    %93 = vmatpush.msra.mxu0 0.0
    %94 = vmatpush.msra.mxu0 0.0
    %95 = vmatpush.msra.mxu0 0.0
    %96 = vmatpush.msra.mxu0 %v75
    %97 = vmatpush.msra.mxu0 %v72
    %98 = vmatpush.msra.mxu0 %v69
    %99 = vmatpush.msra.mxu0 %v66
    %100 = vmatmul.f32.gmra.mxu0 %v82
    %v101 = vpop.f32.mrf.mxu0
    %v102 = vadd.f32 0.0, %v101
    %103 = vdwg.mxu0
    %104 = vmatpush.msra.mxu0 0.0
    %105 = vmatpush.msra.mxu0 0.0
    %106 = vmatpush.msra.mxu0 0.0
    %107 = vmatpush.msra.mxu0 0.0
    %108 = vmatpush.msra.mxu0 0.0
    %109 = vmatpush.msra.mxu0 0.0
    %110 = vmatpush.msra.mxu0 0.0
    %111 = vmatpush.msra.mxu0 0.0
    %112 = vmatpush.msra.mxu0 0.0
    %113 = vmatpush.msra.mxu0 0.0
    %114 = vmatpush.msra.mxu0 0.0
    %115 = vmatpush.msra.mxu0 0.0
    %116 = vmatpush.msra.mxu0 %v76
    %117 = vmatpush.msra.mxu0 %v73
    %118 = vmatpush.msra.mxu0 %v70
    %119 = vmatpush.msra.mxu0 %v67
    %120 = vmatmul.f32.gmra.mxu0 %v82
    %v121 = vpop.f32.mrf.mxu0
    %v122 = vadd.f32 0.0, %v121
    %123 = vdwg.mxu0
    %124 = vmatpush.msra.mxu0 0.0
    %125 = vmatpush.msra.mxu0 0.0
    %126 = vmatpush.msra.mxu0 0.0
    %127 = vmatpush.msra.mxu0 0.0
    %128 = vmatpush.msra.mxu0 0.0
    %129 = vmatpush.msra.mxu0 0.0
    %130 = vmatpush.msra.mxu0 0.0
    %131 = vmatpush.msra.mxu0 0.0
    %132 = vmatpush.msra.mxu0 0.0
    %133 = vmatpush.msra.mxu0 0.0
    %134 = vmatpush.msra.mxu0 0.0
    %135 = vmatpush.msra.mxu0 0.0
    %136 = vmatpush.msra.mxu0 %v77
    %137 = vmatpush.msra.mxu0 %v74
    %138 = vmatpush.msra.mxu0 %v71
    %139 = vmatpush.msra.mxu0 %v68
    %140 = vmatmul.f32.gmra.mxu0 %v82
    %v141 = vpop.f32.mrf.mxu0
    %v142 = vadd.f32 0.0, %v141
    %143 = vdwg.mxu0
    %vm144 = vcmask 130048
    %v146 = vsel %vm144, %v58, 0
    %148 = vmatpush.msra.mxu0 0.0
    %149 = vmatpush.msra.mxu0 0.0
    %150 = vmatpush.msra.mxu0 0.0
    %151 = vmatpush.msra.mxu0 0.0
    %152 = vmatpush.msra.mxu0 0.0
    %153 = vmatpush.msra.mxu0 0.0
    %154 = vmatpush.msra.mxu0 0.0
    %155 = vmatpush.msra.mxu0 0.0
    %156 = vmatpush.msra.mxu0 0.0
    %157 = vmatpush.msra.mxu0 0.0
    %158 = vmatpush.msra.mxu0 0.0
    %159 = vmatpush.msra.mxu0 0.0
    %160 = vmatpush.msra.mxu0 0.0
    %161 = vmatpush.msra.mxu0 0.0
    %162 = vmatpush.msra.mxu0 %v63
    %163 = vmatpush.msra.mxu0 %v60
    %164 = vmatmul.f32.gmra.mxu0 %v146
    %v165 = vpop.f32.mrf.mxu0
    %v166 = vadd.f32 %v102, %v165
    %167 = vdwg.mxu0
    %168 = vmatpush.msra.mxu0 0.0
    %169 = vmatpush.msra.mxu0 0.0
    %170 = vmatpush.msra.mxu0 0.0
    %171 = vmatpush.msra.mxu0 0.0
    %172 = vmatpush.msra.mxu0 0.0
    %173 = vmatpush.msra.mxu0 0.0
    %174 = vmatpush.msra.mxu0 0.0
    %175 = vmatpush.msra.mxu0 0.0
    %176 = vmatpush.msra.mxu0 0.0
    %177 = vmatpush.msra.mxu0 0.0
    %178 = vmatpush.msra.mxu0 0.0
    %179 = vmatpush.msra.mxu0 0.0
    %180 = vmatpush.msra.mxu0 0.0
    %181 = vmatpush.msra.mxu0 0.0
    %182 = vmatpush.msra.mxu0 %v64
    %183 = vmatpush.msra.mxu0 %v61
    %184 = vmatmul.f32.gmra.mxu0 %v146
    %v185 = vpop.f32.mrf.mxu0
    %v186 = vadd.f32 %v122, %v185
    %187 = vdwg.mxu0
    %188 = vmatpush.msra.mxu0 0.0
    %189 = vmatpush.msra.mxu0 0.0
    %190 = vmatpush.msra.mxu0 0.0
    %191 = vmatpush.msra.mxu0 0.0
    %192 = vmatpush.msra.mxu0 0.0
    %193 = vmatpush.msra.mxu0 0.0
    %194 = vmatpush.msra.mxu0 0.0
    %195 = vmatpush.msra.mxu0 0.0
    %196 = vmatpush.msra.mxu0 0.0
    %197 = vmatpush.msra.mxu0 0.0
    %198 = vmatpush.msra.mxu0 0.0
    %199 = vmatpush.msra.mxu0 0.0
    %200 = vmatpush.msra.mxu0 0.0
    %201 = vmatpush.msra.mxu0 0.0
    %202 = vmatpush.msra.mxu0 %v65
    %203 = vmatpush.msra.mxu0 %v62
    %204 = vmatmul.f32.gmra.mxu0 %v146
    %v205 = vpop.f32.mrf.mxu0
    %v206 = vadd.f32 %v142, %v205
    %207 = vdwg.mxu0
    %v209 = vperm.slane %v79, 0
    %v210 = vperm.slane %v79, 1
    %v211 = vperm.slane %v79, 2
    %v215 = vadd.f32 %v166, %v209
    %v216 = vadd.f32 %v186, %v210
    %v217 = vadd.f32 %v206, %v211
    %v218 = vmax.f32 %v215, 0.0
    %v219 = vmax.f32 %v216, 0.0
    %v220 = vld [vmem:[#allocation7 + $0x91] ss:$0 sm:$0xff]
    %v221 = vld [vmem:[#allocation7 + $0x9a] ss:$0 sm:$0xff]
    %v222 = vmul.f32 %v218, %v220
    %223 = vadd.xlane.f32.xlu0 %v222
    %v224 = vpop.xlane.xlu0 %223
    %v225 = vxor.u32 %v224, 2147483648
    %v226 = vmul.f32 %v225, 1.442695
    %v227 = vpow.pop %v226
    %v228 = vadd.f32 %v227, 1.0
    %v229 = vrcp.pop %v228
    %v230 = vmul.f32 %v228, %v229
    %v231 = vsub.f32 1.0, %v230
    %v232 = vmul.f32 %v229, %v231
    %v233 = vadd.f32 %v229, %v232
    %vm234 = vweird.f32 %v228
    %vm235 = vweird.f32 %v229
    %vm236 = vmor %vm234, %vm235
    %v237 = vsel %vm236, %v229, %v233
    %v238 = vand.u32 2147483647, %v228
    %vm239 = vcmp.eq.f32.partialorder %v238, 8.507059e+37
    %v240 = vand.u32 %v228, 2147483648
    %v241 = vor.u32 1.1754944e-38, %v240
    %v242 = vsel %vm239, %v241, %v237
    %v243 = vmul.f32 1.0, %v242
    %v244 = vmul.f32 %v219, %v221
    %245 = vadd.xlane.f32.xlu0 %v244
    %v246 = vpop.xlane.xlu0 %245
    %v247 = vxor.u32 %v246, 2147483648
    %v248 = vmul.f32 %v247, 1.442695
    %v249 = vpow.pop %v248
    %v250 = vadd.f32 %v249, 1.0
    %v251 = vrcp.pop %v250
    %v252 = vmul.f32 %v250, %v251
    %v253 = vsub.f32 1.0, %v252
    %v254 = vmul.f32 %v251, %v253
    %v255 = vadd.f32 %v251, %v254
    %vm256 = vweird.f32 %v250
    %vm257 = vweird.f32 %v251
    %vm258 = vmor %vm256, %vm257
    %v259 = vsel %vm258, %v251, %v255
    %v260 = vand.u32 2147483647, %v250
    %vm261 = vcmp.eq.f32.partialorder %v260, 8.507059e+37
    %v262 = vand.u32 %v250, 2147483648
    %v263 = vor.u32 1.1754944e-38, %v262
    %v264 = vsel %vm261, %v263, %v259
    %v265 = vmul.f32 1.0, %v264
    %v266 = vadd.f32 %v243, %v265
    %v267 = vadd.f32 %v266, 1e-08
    %v268 = vrcp.pop %v267
    %v269 = vmul.f32 %v267, %v268
    %v270 = vsub.f32 1.0, %v269
    %v271 = vmul.f32 %v268, %v270
    %v272 = vadd.f32 %v268, %v271
    %vm273 = vweird.f32 %v267
    %vm274 = vweird.f32 %v268
    %vm275 = vmor %vm273, %vm274
    %v276 = vsel %vm275, %v268, %v272
    %v277 = vand.u32 2147483647, %v267
    %vm278 = vcmp.eq.f32.partialorder %v277, 8.507059e+37
    %v279 = vand.u32 %v267, 2147483648
    %v280 = vor.u32 1.1754944e-38, %v279
    %v281 = vsel %vm278, %v280, %v276
    %v282 = vmul.f32 %v243, %v217
    %v283 = vmul.f32 %v265, %v59
    %v284 = vadd.f32 %v282, %v283
    %v285 = vmul.f32 %v284, %v281
    %286 = vst.msk [vmem:[#allocation8] sm:$0xff] %vm80, %v285
    // Predicated region
    $region26: #{tpu_custom_call.1} parent=1 // pred_check
      _
    $region27: #{tpu_custom_call.1} parent=1 // pred_check_branch
      %288 = sbr.rel (0) target = $region29
    $region28: #{tpu_custom_call.1} parent=1 // pred_region
      %290 = vsyncadd [#allocation4], 0
      %s292 = sshll.u32 [#allocation8], 4
      %s293 = int_to_ptr.vmem [resolvable:$true] %s292
      %s294 = sshll.u32 %s3, 4
      %s295 = int_to_ptr.hbm [resolvable:$true] %s294
      %297 = dma.vmem_to_hbm [thread:$0]  %s293, 128, %s295, [#allocation4]
    $region29: #{tpu_custom_call.1} parent=1 // pred_fallthru
      _
    // Predicated region
    $region30: #{tpu_custom_call.1} parent=1 // pred_check
      _
    $region31: #{tpu_custom_call.1} parent=1 // pred_check_branch
      %299 = sbr.rel (0) target = $region33
    $region32: #{tpu_custom_call.1} parent=1 // pred_region
      %301 = dma.done [#allocation4], 128
    $region33: #{tpu_custom_call.1} parent=1 // pred_fallthru
      _
    %302 = vsyncpa [#allocation3], 1
    %303 = vsyncpa [#allocation6], 1
    %304 = vsyncpa [#allocation4], 1

</llo_original>
